<compile_context>
chip_gen: v5e
topology: v5e:2x2
jax: 0.10.0
libtpu: 0.0.40
codegen_flags: <defaults>
</compile_context>

<pallas_src>
import jax
import jax.numpy as jnp
from jax.experimental import pallas as pl
from jax.experimental.pallas import tpu as pltpu


def _csdnet_kernel(x_ref,     # VMEM (TB, Cin*Lp)     flattened replicate-padded input tile
                   wbig_ref,  # VMEM (Cin*Lp, Cout*L) banded conv weight matrix
                   bcv_ref,   # VMEM (1, Cout*L)      conv bias, repeated per position
                   w1_ref,    # VMEM (Cout*L, hid)    Linear1 weight (transposed)
                   b1_ref,    # VMEM (1, hid)
                   w2_ref,    # VMEM (1, hid)         Linear2 weight as a row
                   b2_ref,    # VMEM (1, 1)
                   out_ref):  # VMEM (TB, 1)
    # Conv1d (same, replicate) + ReLU as a single lane-dense MXU matmul whose
    # output is already in PyTorch's channel-major flatten order (B, Cout*L).
    y = jnp.dot(x_ref[...], wbig_ref[...],
                preferred_element_type=jnp.float32) + bcv_ref[...]
    y = jnp.maximum(y, 0.0)

    # Linear1 + ReLU: one 256-deep contraction on the MXU.
    h = jnp.dot(y, w1_ref[...],
                preferred_element_type=jnp.float32) + b1_ref[...]
    h = jnp.maximum(h, 0.0)

    # Linear2 has a single output column: VPU multiply + lane reduce (XLU)
    # instead of a degenerate 1-column MXU matmul.
    out_ref[...] = jnp.sum(h * w2_ref[...], axis=-1, keepdims=True) + b2_ref[...]


def csdnet_forward(x, params, kernel_size=3):
    """x: (B, Cin, L) float32, PyTorch NCL layout."""
    wc, bc, w1, b1, w2, b2 = params
    B, Cin, L = x.shape
    Cout = wc.shape[0]
    K = kernel_size
    hid = w1.shape[0]
    Lp = L + K - 1
    Din = Cin * Lp
    Dmid = Cout * L

    # --- wrapper-side glue (tiny, done once per call) -----------------------
    # Replicate ('edge') padding for padding='same', stride=1, odd K.
    pad_l = (K - 1) // 2
    pad_r = K - 1 - pad_l
    xp = jnp.pad(x, ((0, 0), (0, 0), (pad_l, pad_r)), mode="edge")
    x_flat = xp.reshape(B, Din).astype(jnp.float32)            # (B, Cin*Lp)

    # Banded conv-as-matmul weight:
    #   W_big[ci*Lp + j, c*L + l] = wc[c, ci, j - l]  if 0 <= j - l < K else 0
    j = jnp.arange(Lp)[:, None]                                # (Lp, 1)
    l = jnp.arange(L)[None, :]                                 # (1, L)
    tap = j - l                                                # (Lp, L)
    valid = (tap >= 0) & (tap < K)
    tap_c = jnp.clip(tap, 0, K - 1)
    wc_g = wc.astype(jnp.float32)[:, :, tap_c]                 # (Cout, Cin, Lp, L)
    wc_g = jnp.where(valid[None, None], wc_g, 0.0)
    w_big = jnp.transpose(wc_g, (1, 2, 0, 3)).reshape(Din, Dmid)

    bc_vec = jnp.repeat(bc.astype(jnp.float32), L).reshape(1, Dmid)
    w1t = jnp.transpose(w1).astype(jnp.float32)                # (Cout*L, hid)
    b1_2 = b1.reshape(1, hid).astype(jnp.float32)
    w2_row = w2.reshape(1, hid).astype(jnp.float32)
    b2_2 = b2.reshape(1, 1).astype(jnp.float32)

    # Batch tiling: sublane-aligned tile, padded batch, auto-pipelined grid.
    TB = min(256, max(8, -(-B // 8) * 8))
    B_pad = -(-B // TB) * TB
    if B_pad != B:
        x_flat = jnp.pad(x_flat, ((0, B_pad - B), (0, 0)))

    out = pl.pallas_call(
        _csdnet_kernel,
        out_shape=jax.ShapeDtypeStruct((B_pad, 1), jnp.float32),
        grid=(B_pad // TB,),
        in_specs=[
            pl.BlockSpec((TB, Din), lambda i: (i, 0)),     # input: tiled over batch
            pl.BlockSpec((Din, Dmid), lambda i: (0, 0)),   # weights: VMEM-resident
            pl.BlockSpec((1, Dmid), lambda i: (0, 0)),
            pl.BlockSpec((Dmid, hid), lambda i: (0, 0)),
            pl.BlockSpec((1, hid), lambda i: (0, 0)),
            pl.BlockSpec((1, hid), lambda i: (0, 0)),
            pl.BlockSpec((1, 1), lambda i: (0, 0)),
        ],
        out_specs=pl.BlockSpec((TB, 1), lambda i: (i, 0)),
        compiler_params=pltpu.CompilerParams(
            dimension_semantics=("parallel",)),
    )(x_flat, w_big, bc_vec, w1t, b1_2, w2_row, b2_2)

    return out[:B]


def csdnet_reference(x, params, kernel_size=3):
    """Pure-JAX reference mirroring the PyTorch forward exactly."""
    wc, bc, w1, b1, w2, b2 = params
    K = kernel_size
    pad_l = (K - 1) // 2
    pad_r = K - 1 - pad_l
    xp = jnp.pad(x, ((0, 0), (0, 0), (pad_l, pad_r)), mode="edge")
    y = jax.lax.conv_general_dilated(
        xp, wc, window_strides=(1,), padding="VALID",
        dimension_numbers=("NCH", "OIH", "NCH"))
    y = jnp.maximum(y + bc[None, :, None], 0.0)           # (B, Cout, L)
    flat = y.reshape(y.shape[0], -1)                       # PyTorch flatten order
    h = jnp.maximum(flat @ w1.T + b1, 0.0)
    return h @ w2.T + b2


if __name__ == "__main__":
    key = jax.random.PRNGKey(0)
    B, emb, L = 2, 1, 16          # x: (batch, emb_size, in_size)
    Cout, K, hid = 16, 3, 32      # conv_arch=[16], kernel_size=3, hid_num=1

    keys = jax.random.split(key, 7)
    x = jax.random.normal(keys[0], (B, emb, L), jnp.float32)
    wc = jax.random.normal(keys[1], (Cout, emb, K), jnp.float32) * 0.3
    bc = jax.random.normal(keys[2], (Cout,), jnp.float32) * 0.1
    w1 = jax.random.normal(keys[3], (hid, Cout * L), jnp.float32) * 0.05
    b1 = jax.random.normal(keys[4], (hid,), jnp.float32) * 0.1
    w2 = jax.random.normal(keys[5], (1, hid), jnp.float32) * 0.1
    b2 = jax.random.normal(keys[6], (1,), jnp.float32) * 0.1
    params = (wc, bc, w1, b1, w2, b2)

    out = csdnet_forward(x, params, kernel_size=K)
    jax.block_until_ready(out)

    ref = csdnet_reference(x, params, kernel_size=K)
    assert out.shape == (B, 1), out.shape
    assert jnp.allclose(out, ref, atol=1e-4, rtol=1e-4), (out, ref)
    print("KERNEL_OK")
</pallas_src>

<mosaic_0001>
module attributes {stable_mosaic.version = 11 : i64} {
  func.func @_csdnet_kernel(%arg0: i32, %arg1: memref<8x18xf32, #tpu.memory_space<vmem>>, %arg2: memref<18x256xf32, #tpu.memory_space<vmem>>, %arg3: memref<1x256xf32, #tpu.memory_space<vmem>>, %arg4: memref<256x32xf32, #tpu.memory_space<vmem>>, %arg5: memref<1x32xf32, #tpu.memory_space<vmem>>, %arg6: memref<1x32xf32, #tpu.memory_space<vmem>>, %arg7: memref<1x1xf32, #tpu.memory_space<vmem>>, %arg8: memref<8x1xf32, #tpu.memory_space<vmem>>) attributes {dimension_semantics = [#tpu.dimension_semantics<parallel>], iteration_bounds = array<i64: 1>, scalar_prefetch = 0 : i64, scratch_operands = 0 : i64, tpu.core_type = #tpu.core_type<tc>, window_params = [{transform_indices = @transform_0, window_bounds = array<i64: 8, 18>}, {pipeline_mode = #tpu.pipeline_mode<synchronous>, transform_indices = @transform_1, window_bounds = array<i64: 18, 256>}, {pipeline_mode = #tpu.pipeline_mode<synchronous>, transform_indices = @transform_2, window_bounds = array<i64: 1, 256>}, {pipeline_mode = #tpu.pipeline_mode<synchronous>, transform_indices = @transform_3, window_bounds = array<i64: 256, 32>}, {pipeline_mode = #tpu.pipeline_mode<synchronous>, transform_indices = @transform_4, window_bounds = array<i64: 1, 32>}, {pipeline_mode = #tpu.pipeline_mode<synchronous>, transform_indices = @transform_5, window_bounds = array<i64: 1, 32>}, {pipeline_mode = #tpu.pipeline_mode<synchronous>, transform_indices = @transform_6, window_bounds = array<i64: 1, 1>}, {transform_indices = @transform_7, window_bounds = array<i64: 8, 1>}]} {
    %c0 = arith.constant 0 : index
    %c0_0 = arith.constant 0 : index
    %0 = vector.load %arg1[%c0, %c0_0] : memref<8x18xf32, #tpu.memory_space<vmem>>, vector<8x18xf32>
    %c0_1 = arith.constant 0 : index
    %c0_2 = arith.constant 0 : index
    %1 = vector.load %arg2[%c0_1, %c0_2] : memref<18x256xf32, #tpu.memory_space<vmem>>, vector<18x256xf32>
    %cst = arith.constant dense<0.000000e+00> : vector<8x256xf32>
    %2 = tpu.matmul %0, %1, %cst {dimension_numbers = #tpu.dot_dimension_numbers<[1], [0], [0], [1], [0, 0, 1, 1], [], []>} : vector<8x18xf32>, vector<18x256xf32>, vector<8x256xf32> -> vector<8x256xf32>
    %c0_3 = arith.constant 0 : index
    %c0_4 = arith.constant 0 : index
    %3 = vector.load %arg3[%c0_3, %c0_4] : memref<1x256xf32, #tpu.memory_space<vmem>>, vector<1x256xf32>
    %4 = vector.broadcast %3 : vector<1x256xf32> to vector<8x256xf32>
    %5 = arith.addf %2, %4 : vector<8x256xf32>
    %cst_5 = arith.constant 0.000000e+00 : f32
    %6 = vector.broadcast %cst_5 : f32 to vector<8x256xf32>
    %7 = arith.maximumf %5, %6 : vector<8x256xf32>
    %c0_6 = arith.constant 0 : index
    %c0_7 = arith.constant 0 : index
    %8 = vector.load %arg4[%c0_6, %c0_7] : memref<256x32xf32, #tpu.memory_space<vmem>>, vector<256x32xf32>
    %cst_8 = arith.constant dense<0.000000e+00> : vector<8x32xf32>
    %9 = tpu.matmul %7, %8, %cst_8 {dimension_numbers = #tpu.dot_dimension_numbers<[1], [0], [0], [1], [0, 0, 1, 1], [], []>} : vector<8x256xf32>, vector<256x32xf32>, vector<8x32xf32> -> vector<8x32xf32>
    %c0_9 = arith.constant 0 : index
    %c0_10 = arith.constant 0 : index
    %10 = vector.load %arg5[%c0_9, %c0_10] : memref<1x32xf32, #tpu.memory_space<vmem>>, vector<1x32xf32>
    %11 = vector.broadcast %10 : vector<1x32xf32> to vector<8x32xf32>
    %12 = arith.addf %9, %11 : vector<8x32xf32>
    %cst_11 = arith.constant 0.000000e+00 : f32
    %13 = vector.broadcast %cst_11 : f32 to vector<8x32xf32>
    %14 = arith.maximumf %12, %13 : vector<8x32xf32>
    %c0_12 = arith.constant 0 : index
    %c0_13 = arith.constant 0 : index
    %15 = vector.load %arg6[%c0_12, %c0_13] : memref<1x32xf32, #tpu.memory_space<vmem>>, vector<1x32xf32>
    %16 = vector.broadcast %15 : vector<1x32xf32> to vector<8x32xf32>
    %17 = arith.mulf %14, %16 : vector<8x32xf32>
    %cst_14 = arith.constant dense<0.000000e+00> : vector<8xf32>
    %18 = vector.multi_reduction <add>, %17, %cst_14 [1] : vector<8x32xf32> to vector<8xf32>
    %19 = vector.shape_cast %18 : vector<8xf32> to vector<8x1xf32>
    %c0_15 = arith.constant 0 : index
    %c0_16 = arith.constant 0 : index
    %20 = vector.load %arg7[%c0_15, %c0_16] : memref<1x1xf32, #tpu.memory_space<vmem>>, vector<1x1xf32>
    %21 = vector.broadcast %20 : vector<1x1xf32> to vector<8x1xf32>
    %22 = arith.addf %19, %21 : vector<8x1xf32>
    %c0_17 = arith.constant 0 : index
    %c0_18 = arith.constant 0 : index
    %23 = vector.load %arg8[%c0_17, %c0_18] : memref<8x1xf32, #tpu.memory_space<vmem>>, vector<8x1xf32>
    tpu.vector_store %arg8[%c0_17, %c0_18], %22 {strides = array<i32>} : memref<8x1xf32, #tpu.memory_space<vmem>>, vector<8x1xf32>,
    return
  }
  func.func @transform_0(%arg0: i32) -> (i32, i32) {
    %c0_i32 = arith.constant 0 : i32
    %c0_i32_0 = arith.constant 0 : i32
    return %arg0, %c0_i32 : i32, i32
  }
  func.func @transform_1(%arg0: i32) -> (i32, i32) {
    %c0_i32 = arith.constant 0 : i32
    %c0_i32_0 = arith.constant 0 : i32
    %c0_i32_1 = arith.constant 0 : i32
    return %c0_i32, %c0_i32_0 : i32, i32
  }
  func.func @transform_2(%arg0: i32) -> (i32, i32) {
    %c0_i32 = arith.constant 0 : i32
    %c0_i32_0 = arith.constant 0 : i32
    %c0_i32_1 = arith.constant 0 : i32
    return %c0_i32, %c0_i32_0 : i32, i32
  }
  func.func @transform_3(%arg0: i32) -> (i32, i32) {
    %c0_i32 = arith.constant 0 : i32
    %c0_i32_0 = arith.constant 0 : i32
    %c0_i32_1 = arith.constant 0 : i32
    return %c0_i32, %c0_i32_0 : i32, i32
  }
  func.func @transform_4(%arg0: i32) -> (i32, i32) {
    %c0_i32 = arith.constant 0 : i32
    %c0_i32_0 = arith.constant 0 : i32
    %c0_i32_1 = arith.constant 0 : i32
    return %c0_i32, %c0_i32_0 : i32, i32
  }
  func.func @transform_5(%arg0: i32) -> (i32, i32) {
    %c0_i32 = arith.constant 0 : i32
    %c0_i32_0 = arith.constant 0 : i32
    %c0_i32_1 = arith.constant 0 : i32
    return %c0_i32, %c0_i32_0 : i32, i32
  }
  func.func @transform_6(%arg0: i32) -> (i32, i32) {
    %c0_i32 = arith.constant 0 : i32
    %c0_i32_0 = arith.constant 0 : i32
    %c0_i32_1 = arith.constant 0 : i32
    return %c0_i32, %c0_i32_0 : i32, i32
  }
  func.func @transform_7(%arg0: i32) -> (i32, i32) {
    %c0_i32 = arith.constant 0 : i32
    %c0_i32_0 = arith.constant 0 : i32
    return %arg0, %c0_i32 : i32, i32
  }
}

</mosaic_0001>

<llo_original>
// kernel: tpu_custom_call.1
$region0: #{tpu_custom_call.1}
  #allocation0 [shape = 'u32[]', space=smem, size = 0x4, offset = 0x4, fixed_abs, tag = 'smem constant byte address 0x4 - core index']
  #allocation1 [shape = 'u32[72,128]{1,0:T(1,128)}', space=vmem, size = 0x9000, scoped, tag = 'internal scratch']
  #allocation2 [shape = 'f32[1,1]{1,0:T(1,128)S(1)}', space=vmem, size = 0x200, scoped, tag = 'scoped memory for tpu_custom_call.1']
  %s0 = inlined_call_operand.vmem [shape: f32[8,18], index: 0, kind: input, shape index: {}]
  %s1 = inlined_call_operand.vmem [shape: f32[18,256], index: 1, kind: input, shape index: {}]
  %s2 = inlined_call_operand.vmem [shape: f32[1,256], index: 2, kind: input, shape index: {}]
  %s3 = inlined_call_operand.vmem [shape: f32[256,32], index: 3, kind: input, shape index: {}]
  %s4 = inlined_call_operand.vmem [shape: f32[1,32], index: 4, kind: input, shape index: {}]
  %s5 = inlined_call_operand.vmem [shape: f32[1,32], index: 5, kind: input, shape index: {}]
  %s6 = inlined_call_operand.<no memory space> [shape: f32[1,1], index: 6, kind: input, shape index: {}]
  %s7 = inlined_call_operand.vmem [shape: f32[8,1], index: 7, kind: output, shape index: {}]
  %s8 = sld [smem:[#allocation0]]
  $region38: #{tpu_custom_call.1} parent=0
    _
  %s10 = ssub.s32 1, %s8
  %s11 = scalar_select 0, %s10, %s8
  %v12 = vstv %s6
  %13 = vst [vmem:[#allocation2] sm:$0x1] %v12
  // Predicated region
  $region2: #{tpu_custom_call.1} parent=0 // pred_check
    _
  $region3: #{tpu_custom_call.1} parent=0 // pred_check_branch
    %15 = sbr.rel (0) target = $region5
  $region4: #{tpu_custom_call.1} parent=0 // pred_region
    _
  $region5: #{tpu_custom_call.1} parent=0 // pred_fallthru
    _
  // Predicated region
  $region6: #{tpu_custom_call.1} parent=0 // pred_check
    _
  $region7: #{tpu_custom_call.1} parent=0 // pred_check_branch
    %17 = sbr.rel (0) target = $region9
  $region8: #{tpu_custom_call.1} parent=0 // pred_region
    _
  $region9: #{tpu_custom_call.1} parent=0 // pred_fallthru
    _
  // Predicated region
  $region10: #{tpu_custom_call.1} parent=0 // pred_check
    _
  $region11: #{tpu_custom_call.1} parent=0 // pred_check_branch
    %19 = sbr.rel (0) target = $region13
  $region12: #{tpu_custom_call.1} parent=0 // pred_region
    _
  $region13: #{tpu_custom_call.1} parent=0 // pred_fallthru
    _
  // Predicated region
  $region14: #{tpu_custom_call.1} parent=0 // pred_check
    _
  $region15: #{tpu_custom_call.1} parent=0 // pred_check_branch
    %21 = sbr.rel (0) target = $region17
  $region16: #{tpu_custom_call.1} parent=0 // pred_region
    _
  $region17: #{tpu_custom_call.1} parent=0 // pred_fallthru
    _
  // Predicated region
  $region18: #{tpu_custom_call.1} parent=0 // pred_check
    _
  $region19: #{tpu_custom_call.1} parent=0 // pred_check_branch
    %23 = sbr.rel (0) target = $region21
  $region20: #{tpu_custom_call.1} parent=0 // pred_region
    _
  $region21: #{tpu_custom_call.1} parent=0 // pred_fallthru
    _
  // Predicated region
  $region22: #{tpu_custom_call.1} parent=0 // pred_check
    _
  $region23: #{tpu_custom_call.1} parent=0 // pred_check_branch
    %25 = sbr.rel (0) target = $region25
  $region24: #{tpu_custom_call.1} parent=0 // pred_region
    _
  $region25: #{tpu_custom_call.1} parent=0 // pred_fallthru
    _
  // Predicated region
  $region26: #{tpu_custom_call.1} parent=0 // pred_check
    _
  $region27: #{tpu_custom_call.1} parent=0 // pred_check_branch
    %27 = sbr.rel (0) target = $region29
  $region28: #{tpu_custom_call.1} parent=0 // pred_region
    _
  $region29: #{tpu_custom_call.1} parent=0 // pred_fallthru
    _
  %v28 = vld [vmem:[%s0] sm:$0xff]
  %v29 = vld [vmem:[%s1] sm:$0xff]
  %v30 = vld [vmem:[%s1 + $0x8] sm:$0xff]
  %v31 = vld [vmem:[%s1 + $0x10] sm:$0xff]
  %v32 = vld [vmem:[%s1 + $0x18] sm:$0xff]
  %v33 = vld [vmem:[%s1 + $0x20] sm:$0x3]
  %v34 = vld [vmem:[%s1 + $0x28] sm:$0x3]
  %v35 = vld [vmem:[%s2] sm:$0x3]
  %v37 = vperm.slane %v35, 0
  %v38 = vperm.slane %v35, 1
  %vm41 = vcmask 146432
  %v43 = vsel %vm41, %v28, 0
  %vm45 = vcmask 1041408
  %v47 = vsel %vm45, %v33, 0
  %v50 = vsel %vm45, %v34, 0
  %52 = vmatpush.msra.mxu0 0.0
  %53 = vmatpush.msra.mxu0 0.0
  %54 = vmatpush.msra.mxu0 0.0
  %55 = vmatpush.msra.mxu0 0.0
  %56 = vmatpush.msra.mxu0 0.0
  %57 = vmatpush.msra.mxu0 0.0
  %58 = vmatpush.msra.mxu0 0.0
  %59 = vmatpush.msra.mxu0 0.0
  %60 = vmatpush.msra.mxu0 0.0
  %61 = vmatpush.msra.mxu0 0.0
  %62 = vmatpush.msra.mxu0 0.0
  %63 = vmatpush.msra.mxu0 0.0
  %64 = vmatpush.msra.mxu0 0.0
  %65 = vmatpush.msra.mxu0 %v47
  %66 = vmatpush.msra.mxu0 %v31
  %67 = vmatpush.msra.mxu0 %v29
  %68 = vmatmul.f32.gmra.mxu0 %v43
  %v69 = vpop.f32.mrf.mxu0
  %v70 = vadd.f32 %v37, %v69
  %71 = vdwg.mxu0
  %72 = vmatpush.msra.mxu0 0.0
  %73 = vmatpush.msra.mxu0 0.0
  %74 = vmatpush.msra.mxu0 0.0
  %75 = vmatpush.msra.mxu0 0.0
  %76 = vmatpush.msra.mxu0 0.0
  %77 = vmatpush.msra.mxu0 0.0
  %78 = vmatpush.msra.mxu0 0.0
  %79 = vmatpush.msra.mxu0 0.0
  %80 = vmatpush.msra.mxu0 0.0
  %81 = vmatpush.msra.mxu0 0.0
  %82 = vmatpush.msra.mxu0 0.0
  %83 = vmatpush.msra.mxu0 0.0
  %84 = vmatpush.msra.mxu0 0.0
  %85 = vmatpush.msra.mxu0 %v50
  %86 = vmatpush.msra.mxu0 %v32
  %87 = vmatpush.msra.mxu0 %v30
  %88 = vmatmul.f32.gmra.mxu0 %v43
  %v89 = vpop.f32.mrf.mxu0
  %v90 = vadd.f32 %v38, %v89
  %91 = vdwg.mxu0
  %v92 = vmax.f32 %v70, 0.0
  %v93 = vmax.f32 %v90, 0.0
  %v94 = vld [vmem:[%s3] sm:$0xff]
  %v95 = vld [vmem:[%s3 + $0x8] sm:$0xff]
  %v96 = vld [vmem:[%s3 + $0x10] sm:$0xff]
  %v97 = vld [vmem:[%s3 + $0x18] sm:$0xff]
  %v98 = vld [vmem:[%s3 + $0x20] sm:$0xff]
  %v99 = vld [vmem:[%s3 + $0x28] sm:$0xff]
  %v100 = vld [vmem:[%s3 + $0x30] sm:$0xff]
  %v101 = vld [vmem:[%s3 + $0x38] sm:$0xff]
  %v102 = vld [vmem:[%s3 + $0x40] sm:$0xff]
  %v103 = vld [vmem:[%s3 + $0x48] sm:$0xff]
  %v104 = vld [vmem:[%s3 + $0x50] sm:$0xff]
  %v105 = vld [vmem:[%s3 + $0x58] sm:$0xff]
  %v106 = vld [vmem:[%s3 + $0x60] sm:$0xff]
  %v107 = vld [vmem:[%s3 + $0x68] sm:$0xff]
  %v108 = vld [vmem:[%s3 + $0x70] sm:$0xff]
  %v109 = vld [vmem:[%s3 + $0x78] sm:$0xff]
  %v110 = vld [vmem:[%s3 + $0x80] sm:$0xff]
  %v111 = vld [vmem:[%s3 + $0x88] sm:$0xff]
  %v112 = vld [vmem:[%s3 + $0x90] sm:$0xff]
  %v113 = vld [vmem:[%s3 + $0x98] sm:$0xff]
  %v114 = vld [vmem:[%s3 + $0xa0] sm:$0xff]
  %v115 = vld [vmem:[%s3 + $0xa8] sm:$0xff]
  %v116 = vld [vmem:[%s3 + $0xb0] sm:$0xff]
  %v117 = vld [vmem:[%s3 + $0xb8] sm:$0xff]
  %v118 = vld [vmem:[%s3 + $0xc0] sm:$0xff]
  %v119 = vld [vmem:[%s3 + $0xc8] sm:$0xff]
  %v120 = vld [vmem:[%s3 + $0xd0] sm:$0xff]
  %v121 = vld [vmem:[%s3 + $0xd8] sm:$0xff]
  %v122 = vld [vmem:[%s3 + $0xe0] sm:$0xff]
  %v123 = vld [vmem:[%s3 + $0xe8] sm:$0xff]
  %v124 = vld [vmem:[%s3 + $0xf0] sm:$0xff]
  %v125 = vld [vmem:[%s3 + $0xf8] sm:$0xff]
  %v126 = vld [vmem:[%s4] sm:$0x1]
  %v128 = vperm.slane %v126, 0
  %130 = vmatpush.msra.mxu0 %v109
  %131 = vmatpush.msra.mxu0 %v108
  %132 = vmatpush.msra.mxu0 %v107
  %133 = vmatpush.msra.mxu0 %v106
  %134 = vmatpush.msra.mxu0 %v105
  %135 = vmatpush.msra.mxu0 %v104
  %136 = vmatpush.msra.mxu0 %v103
  %137 = vmatpush.msra.mxu0 %v102
  %138 = vmatpush.msra.mxu0 %v101
  %139 = vmatpush.msra.mxu0 %v100
  %140 = vmatpush.msra.mxu0 %v99
  %141 = vmatpush.msra.mxu0 %v98
  %142 = vmatpush.msra.mxu0 %v97
  %143 = vmatpush.msra.mxu0 %v96
  %144 = vmatpush.msra.mxu0 %v95
  %145 = vmatpush.msra.mxu0 %v94
  %146 = vmatmul.f32.gmra.mxu0 %v92
  %v147 = vpop.f32.mrf.mxu0
  %v148 = vadd.f32 %v128, %v147
  %149 = vdwg.mxu0
  %150 = vmatpush.msra.mxu0 %v125
  %151 = vmatpush.msra.mxu0 %v124
  %152 = vmatpush.msra.mxu0 %v123
  %153 = vmatpush.msra.mxu0 %v122
  %154 = vmatpush.msra.mxu0 %v121
  %155 = vmatpush.msra.mxu0 %v120
  %156 = vmatpush.msra.mxu0 %v119
  %157 = vmatpush.msra.mxu0 %v118
  %158 = vmatpush.msra.mxu0 %v117
  %159 = vmatpush.msra.mxu0 %v116
  %160 = vmatpush.msra.mxu0 %v115
  %161 = vmatpush.msra.mxu0 %v114
  %162 = vmatpush.msra.mxu0 %v113
  %163 = vmatpush.msra.mxu0 %v112
  %164 = vmatpush.msra.mxu0 %v111
  %165 = vmatpush.msra.mxu0 %v110
  %166 = vmatmul.f32.gmra.mxu0 %v93
  %v167 = vpop.f32.mrf.mxu0
  %v168 = vadd.f32 %v148, %v167
  %169 = vdwg.mxu0
  %v170 = vmax.f32 %v168, 0.0
  %v171 = vld [vmem:[%s5] sm:$0x1]
  %v173 = vperm.slane %v171, 0
  %v175 = vmul.f32 %v170, %v173
  %vm176 = vcmask 261120
  %v177 = vsel %vm176, %v175, 0.0
  %178 = vadd.xlane.f32.xlu0 %v177
  %v179 = vpop.xlane.xlu0 %178
  %v180 = vld [vmem:[#allocation2] sm:$0x1]
  %v182 = vperm.slane %v180, 0
  %v184 = vadd.f32 %v179, %v182
  %vm185 = vcmask 7168
  %186 = vst.msk [vmem:[%s7] sm:$0xff] %vm185, %v184
  // Predicated region
  $region30: #{tpu_custom_call.1} parent=0 // pred_check
    _
  $region31: #{tpu_custom_call.1} parent=0 // pred_check_branch
    %188 = sbr.rel (0) target = $region33
  $region32: #{tpu_custom_call.1} parent=0 // pred_region
    _
  $region33: #{tpu_custom_call.1} parent=0 // pred_fallthru
    _
  // Predicated region
  $region34: #{tpu_custom_call.1} parent=0 // pred_check
    _
  $region35: #{tpu_custom_call.1} parent=0 // pred_check_branch
    %190 = sbr.rel (0) target = $region37
  $region36: #{tpu_custom_call.1} parent=0 // pred_region
    _
  $region37: #{tpu_custom_call.1} parent=0 // pred_fallthru
    _

</llo_original>
